<compile_context>
chip_gen: v5e
topology: v5e:2x2
jax: 0.10.0
libtpu: 0.0.40
codegen_flags: <defaults>
</compile_context>

<pallas_src>
import jax
import jax.numpy as jnp
from jax.experimental import pallas as pl
from jax.experimental.pallas import tpu as pltpu


_LANE = 128
_MAX_TILE_LANES = 8192          # cap on a single block's lane width
_VMEM_BLOCK_BUDGET = 24 << 20   # bytes for double-buffered blocks (v7x headroom)
_VMEM_LIMIT = 48 << 20          # scoped VMEM limit handed to Mosaic


def _relu_counter_kernel(x_ref, out_ref, cnt_ref):
    # Resident f32 counter accumulator across the N (last, "arbitrary") axis.
    @pl.when(pl.program_id(1) == 0)
    def _():
        cnt_ref[...] = jnp.zeros_like(cnt_ref)

    x = x_ref[...]
    y = jnp.maximum(x, 0)            # VPU elementwise (hot path)
    out_ref[...] = y
    # Sublane reduction over the batch axis runs on the XLU slot, i.e. it is
    # free filler next to the vld/vst traffic that actually bounds this kernel.
    cnt_ref[...] += jnp.sum(y.astype(jnp.float32), axis=0, keepdims=True)


def _sublane_tile(dtype) -> int:
    itemsize = jnp.dtype(dtype).itemsize
    return max(8, 32 // itemsize)    # 8 for f32, 16 for bf16, 32 for 8-bit


def _pick_blocks(N, F, dtype):
    """Largest lane tile fitting the VMEM budget; tile N only if needed."""
    itemsize = jnp.dtype(dtype).itemsize
    f_cap = min(pl.cdiv(F, _LANE) * _LANE, _MAX_TILE_LANES)
    sub = _sublane_tile(dtype)

    # Candidate batch-block sizes: full N first, then sublane-aligned divisors
    # (descending) so the last N block never needs padding/guarding.
    tns = [N] + sorted({d for d in range(sub, N, sub) if N % d == 0},
                       reverse=True)
    for tn in tns:
        # bytes per lane: double-buffered input + output blocks + f32 counter.
        per_lane = 2 * (2 * tn * itemsize + 4)
        tile = (_VMEM_BLOCK_BUDGET // per_lane) // _LANE * _LANE
        tile = min(int(tile), f_cap)
        if tile >= _LANE:
            return tn, tile
    return N, _LANE  # last resort


def custom_relu(x, training=True, neuron_counter=None):
    """Pallas equivalent of CustomReLU.forward.

    Args:
      x: (N, C, H, W) array (NCHW, like PyTorch).
      training: if True, also returns the updated neuron_counter
                (output.sum(dim=0), accumulated with any prior counter, in f32).
      neuron_counter: optional previous counter of shape (C, H, W).

    Returns:
      output (N, C, H, W), and (if training) new neuron_counter (C, H, W) f32.
    """
    N = x.shape[0]
    feat_shape = x.shape[1:]
    F = 1
    for d in feat_shape:
        F *= d
    x2d = x.reshape(N, F)

    tn, tile = _pick_blocks(N, F, x.dtype)
    grid = (pl.cdiv(F, tile), N // tn)   # reduction (N) axis last

    out2d, cnt2d = pl.pallas_call(
        _relu_counter_kernel,
        grid=grid,
        in_specs=[pl.BlockSpec((tn, tile), lambda f, n: (n, f))],
        out_specs=[
            pl.BlockSpec((tn, tile), lambda f, n: (n, f)),
            pl.BlockSpec((1, tile), lambda f, n: (0, f)),   # resident over N
        ],
        out_shape=[
            jax.ShapeDtypeStruct((N, F), x.dtype),
            jax.ShapeDtypeStruct((1, F), jnp.float32),
        ],
        compiler_params=pltpu.CompilerParams(
            dimension_semantics=("parallel", "arbitrary"),
            vmem_limit_bytes=_VMEM_LIMIT,
        ),
    )(x2d)

    out = out2d.reshape(x.shape)
    if not training:
        # TODO(synk): eval-mode wandb logging / counter reset is host-side
        # bookkeeping (module state), not kernel work.
        return out

    batch_sum = cnt2d[0].reshape(feat_shape)
    if neuron_counter is None:
        new_counter = batch_sum
    else:
        new_counter = neuron_counter.astype(jnp.float32) + batch_sum
    return out, new_counter


if __name__ == "__main__":
    key = jax.random.PRNGKey(0)
    x = jax.random.normal(key, (2, 4, 16, 16), dtype=jnp.float32)

    out, counter = custom_relu(x, training=True)
    out = jax.block_until_ready(out)
    counter = jax.block_until_ready(counter)

    # Sanity checks against a plain-JAX reference.
    ref_out = jnp.maximum(x, 0.0)
    ref_cnt = ref_out.sum(axis=0)
    assert out.shape == x.shape
    assert counter.shape == x.shape[1:]
    assert jnp.allclose(out, ref_out)
    assert jnp.allclose(counter, ref_cnt, atol=1e-5)

    # Second call accumulates the counter, like the PyTorch module.
    out2, counter2 = custom_relu(x, training=True, neuron_counter=counter)
    jax.block_until_ready(counter2)
    assert jnp.allclose(counter2, 2.0 * ref_cnt, atol=1e-5)

    # Eval mode: ReLU only.
    out_eval = jax.block_until_ready(custom_relu(x, training=False))
    assert jnp.allclose(out_eval, ref_out)

    print("KERNEL_OK")
</pallas_src>

<mosaic_0001>
module attributes {stable_mosaic.version = 11 : i64} {
  func.func @_relu_counter_kernel(%arg0: i32, %arg1: i32, %arg2: memref<2x1024xf32, #tpu.memory_space<vmem>>, %arg3: memref<2x1024xf32, #tpu.memory_space<vmem>>, %arg4: memref<1x1024xf32, #tpu.memory_space<vmem>>) attributes {dimension_semantics = [#tpu.dimension_semantics<parallel>, #tpu.dimension_semantics<arbitrary>], iteration_bounds = array<i64: 1, 1>, scalar_prefetch = 0 : i64, scratch_operands = 0 : i64, tpu.core_type = #tpu.core_type<tc>, window_params = [{transform_indices = @transform_0, window_bounds = array<i64: 2, 1024>}, {transform_indices = @transform_1, window_bounds = array<i64: 2, 1024>}, {transform_indices = @transform_2, window_bounds = array<i64: 1, 1024>}]} {
    %c0_i32 = arith.constant 0 : i32
    %0 = arith.cmpi eq, %arg1, %c0_i32 : i32
    %1 = arith.extui %0 : i1 to i32
    %c0_i32_0 = arith.constant 0 : i32
    %2 = arith.cmpi ne, %1, %c0_i32_0 : i32
    scf.if %2 {
      %cst_9 = arith.constant 0.000000e+00 : f32
      %12 = vector.broadcast %cst_9 : f32 to vector<1x1024xf32>
      %c0_10 = arith.constant 0 : index
      %c0_11 = arith.constant 0 : index
      %13 = vector.load %arg4[%c0_10, %c0_11] : memref<1x1024xf32, #tpu.memory_space<vmem>>, vector<1x1024xf32>
      tpu.vector_store %arg4[%c0_10, %c0_11], %12 {strides = array<i32>} : memref<1x1024xf32, #tpu.memory_space<vmem>>, vector<1x1024xf32>,
    } else {
    }
    %c0 = arith.constant 0 : index
    %c0_1 = arith.constant 0 : index
    %3 = vector.load %arg2[%c0, %c0_1] : memref<2x1024xf32, #tpu.memory_space<vmem>>, vector<2x1024xf32>
    %cst = arith.constant 0.000000e+00 : f32
    %4 = vector.broadcast %cst : f32 to vector<2x1024xf32>
    %5 = arith.maximumf %3, %4 : vector<2x1024xf32>
    %c0_2 = arith.constant 0 : index
    %c0_3 = arith.constant 0 : index
    %6 = vector.load %arg3[%c0_2, %c0_3] : memref<2x1024xf32, #tpu.memory_space<vmem>>, vector<2x1024xf32>
    tpu.vector_store %arg3[%c0_2, %c0_3], %5 {strides = array<i32>} : memref<2x1024xf32, #tpu.memory_space<vmem>>, vector<2x1024xf32>,
    %c0_4 = arith.constant 0 : index
    %c0_5 = arith.constant 0 : index
    %7 = vector.load %arg4[%c0_4, %c0_5] : memref<1x1024xf32, #tpu.memory_space<vmem>>, vector<1x1024xf32>
    %cst_6 = arith.constant dense<0.000000e+00> : vector<1024xf32>
    %8 = vector.multi_reduction <add>, %5, %cst_6 [0] : vector<2x1024xf32> to vector<1024xf32>
    %9 = vector.shape_cast %8 : vector<1024xf32> to vector<1x1024xf32>
    %10 = arith.addf %7, %9 : vector<1x1024xf32>
    %c0_7 = arith.constant 0 : index
    %c0_8 = arith.constant 0 : index
    %11 = vector.load %arg4[%c0_7, %c0_8] : memref<1x1024xf32, #tpu.memory_space<vmem>>, vector<1x1024xf32>
    tpu.vector_store %arg4[%c0_7, %c0_8], %10 {strides = array<i32>} : memref<1x1024xf32, #tpu.memory_space<vmem>>, vector<1x1024xf32>,
    return
  }
  func.func @transform_0(%arg0: i32, %arg1: i32) -> (i32, i32) {
    %c0_i32 = arith.constant 0 : i32
    return %arg1, %arg0 : i32, i32
  }
  func.func @transform_1(%arg0: i32, %arg1: i32) -> (i32, i32) {
    %c0_i32 = arith.constant 0 : i32
    return %arg1, %arg0 : i32, i32
  }
  func.func @transform_2(%arg0: i32, %arg1: i32) -> (i32, i32) {
    %c0_i32 = arith.constant 0 : i32
    %c0_i32_0 = arith.constant 0 : i32
    return %c0_i32, %arg0 : i32, i32
  }
}

</mosaic_0001>

<llo_original>
// kernel: tpu_custom_call.1
$region0: #{tpu_custom_call.1}
  #allocation0 [shape = 'u32[]', space=smem, size = 0x4, offset = 0x4, fixed_abs, tag = 'smem constant byte address 0x4 - core index']
  #allocation1 [shape = 'u32[72,128]{1,0:T(1,128)}', space=vmem, size = 0x9000, scoped, tag = 'internal scratch']
  %s0 = inlined_call_operand.hbm [shape: f32[2,1024], index: 0, kind: input, shape index: {}]
  %s1 = inlined_call_operand.hbm [shape: f32[2,1024], index: 1, kind: output, shape index: {0}]
  %s2 = inlined_call_operand.hbm [shape: f32[1,1024], index: 2, kind: output, shape index: {1}]
  %3 = xla_tuple %s1, %s2
  %s4 = sld [smem:[#allocation0]]
  $region30: #{tpu_custom_call.1} parent=0
    _
  %s6 = ssub.s32 1, %s4
  %s7 = scalar_select 0, %s6, %s4
  $region1: #{tpu_custom_call.1} parent=0
    #allocation2 [shape = 'u8[8192]{0}', space=vmem, size = 0x2000, scoped, tag = 'input window, operand 0, single buffered']
    #allocation3 [shape = 's32[1]{0}', space=sflag, size = 0x4, scoped, tag = 'scoped memory for tpu_custom_call.1']
    #allocation4 [shape = 's32[1]{0}', space=sflag, size = 0x4, scoped, tag = 'scoped memory for tpu_custom_call.1']
    #allocation5 [shape = 'u8[8192]{0}', space=vmem, size = 0x2000, scoped, tag = 'output window, operand 0, single buffered']
    #allocation6 [shape = 'u8[4096]{0}', space=vmem, size = 0x1000, scoped, tag = 'output window, operand 1, single buffered']
    #allocation7 [shape = 's32[1]{0}', space=sflag, size = 0x4, scoped, tag = 'scoped memory for tpu_custom_call.1']
    %8 = vsyncpa [#allocation3], 0
    %9 = vsyncpa [#allocation4], 0
    %10 = vsyncpa [#allocation7], 0
    // Predicated region
    $region2: #{tpu_custom_call.1} parent=1 // pred_check
      _
    $region3: #{tpu_custom_call.1} parent=1 // pred_check_branch
      %12 = sbr.rel (0) target = $region5
    $region4: #{tpu_custom_call.1} parent=1 // pred_region
      %14 = vsyncadd [#allocation3], 0
      %s16 = sshll.u32 %s0, 4
      %s17 = int_to_ptr.hbm [resolvable:$true] %s16
      %s18 = sshll.u32 [#allocation2], 4
      %s19 = int_to_ptr.vmem [resolvable:$true] %s18
      %21 = dma.hbm_to_vmem [thread:$0]  %s17, 256, %s19, [#allocation3]
    $region5: #{tpu_custom_call.1} parent=1 // pred_fallthru
      _
    // Predicated region
    $region6: #{tpu_custom_call.1} parent=1 // pred_check
      _
    $region7: #{tpu_custom_call.1} parent=1 // pred_check_branch
      %23 = sbr.rel (0) target = $region9
    $region8: #{tpu_custom_call.1} parent=1 // pred_region
      %25 = dma.done [#allocation3], 256
    $region9: #{tpu_custom_call.1} parent=1 // pred_fallthru
      _
    %p26 = scmp.eq.s32.totalorder 0, 0
    // Predicated region
    $region10: #{tpu_custom_call.1} parent=1 // pred_check
      %p27 = pneg %p26
    $region11: #{tpu_custom_call.1} parent=1 // pred_check_branch
      %29 = sbr.rel (%p27) target = $region13
    $region12: #{tpu_custom_call.1} parent=1 // pred_region
      %30 = vst [vmem:[#allocation6] sm:$0xff] 0.0
    $region13: #{tpu_custom_call.1} parent=1 // pred_fallthru
      _
    %v31 = vld [vmem:[#allocation2] sm:$0xff]
    %v32 = vld [vmem:[#allocation2 + $0x8] sm:$0xff]
    %v33 = vmax.f32 %v31, 0.0
    %v34 = vmax.f32 %v32, 0.0
    %35 = vst [vmem:[#allocation5] sm:$0xff] %v33
    %36 = vst [vmem:[#allocation5 + $0x8] sm:$0xff] %v34
    %v37 = vld [vmem:[#allocation6] sm:$0xff]
    %40 = vst [vmem:[#allocation1] ss:$4 sm:$0xff] %v33
    %s41 = scalar_lea.vmem [#allocation1], 32
    %42 = vst [vmem:[%s41] ss:$4 sm:$0xff] %v34
    %v43 = vld.sshfl [vmem:[#allocation1] sm:$0xff pattern:$0x73625140]
    %v44 = vld.sshfl [vmem:[#allocation1 + $0x8] sm:$0xff pattern:$0x73625140]
    %v45 = vld.sshfl [vmem:[#allocation1 + $0x10] sm:$0xff pattern:$0x73625140]
    %v46 = vld.sshfl [vmem:[#allocation1 + $0x18] sm:$0xff pattern:$0x73625140]
    %v47 = vld.sshfl [vmem:[#allocation1 + $0x20] sm:$0xff pattern:$0x73625140]
    %v48 = vld.sshfl [vmem:[#allocation1 + $0x28] sm:$0xff pattern:$0x73625140]
    %v49 = vld.sshfl [vmem:[#allocation1 + $0x30] sm:$0xff pattern:$0x73625140]
    %v50 = vld.sshfl [vmem:[#allocation1 + $0x38] sm:$0xff pattern:$0x73625140]
    %vm59 = vcmask 1041408
    %v60 = vsel %vm59, %v43, 0.0
    %v61 = vrot.slane %v60, 4
    %v62 = vadd.f32 %v60, %v61
    %v63 = vrot.slane %v62, 2
    %v64 = vadd.f32 %v62, %v63
    %v65 = vrot.slane %v64, 1
    %v66 = vadd.f32 %v64, %v65
    %v67 = vsel %vm59, %v44, 0.0
    %v68 = vrot.slane %v67, 4
    %v69 = vadd.f32 %v67, %v68
    %v70 = vrot.slane %v69, 2
    %v71 = vadd.f32 %v69, %v70
    %v72 = vrot.slane %v71, 1
    %v73 = vadd.f32 %v71, %v72
    %v74 = vsel %vm59, %v45, 0.0
    %v75 = vrot.slane %v74, 4
    %v76 = vadd.f32 %v74, %v75
    %v77 = vrot.slane %v76, 2
    %v78 = vadd.f32 %v76, %v77
    %v79 = vrot.slane %v78, 1
    %v80 = vadd.f32 %v78, %v79
    %v81 = vsel %vm59, %v46, 0.0
    %v82 = vrot.slane %v81, 4
    %v83 = vadd.f32 %v81, %v82
    %v84 = vrot.slane %v83, 2
    %v85 = vadd.f32 %v83, %v84
    %v86 = vrot.slane %v85, 1
    %v87 = vadd.f32 %v85, %v86
    %v88 = vsel %vm59, %v47, 0.0
    %v89 = vrot.slane %v88, 4
    %v90 = vadd.f32 %v88, %v89
    %v91 = vrot.slane %v90, 2
    %v92 = vadd.f32 %v90, %v91
    %v93 = vrot.slane %v92, 1
    %v94 = vadd.f32 %v92, %v93
    %v95 = vsel %vm59, %v48, 0.0
    %v96 = vrot.slane %v95, 4
    %v97 = vadd.f32 %v95, %v96
    %v98 = vrot.slane %v97, 2
    %v99 = vadd.f32 %v97, %v98
    %v100 = vrot.slane %v99, 1
    %v101 = vadd.f32 %v99, %v100
    %v102 = vsel %vm59, %v49, 0.0
    %v103 = vrot.slane %v102, 4
    %v104 = vadd.f32 %v102, %v103
    %v105 = vrot.slane %v104, 2
    %v106 = vadd.f32 %v104, %v105
    %v107 = vrot.slane %v106, 1
    %v108 = vadd.f32 %v106, %v107
    %v109 = vsel %vm59, %v50, 0.0
    %v110 = vrot.slane %v109, 4
    %v111 = vadd.f32 %v109, %v110
    %v112 = vrot.slane %v111, 2
    %v113 = vadd.f32 %v111, %v112
    %v114 = vrot.slane %v113, 1
    %v115 = vadd.f32 %v113, %v114
    %v124 = vrot.slane %v73, 7
    %v125 = vrot.slane %v80, 6
    %v126 = vrot.slane %v87, 5
    %v127 = vrot.slane %v94, 4
    %v128 = vrot.slane %v101, 3
    %v129 = vrot.slane %v108, 2
    %v130 = vrot.slane %v115, 1
    %vm131 = vcmask 1040384
    %v132 = vsel %vm131, %v66, %v124
    %vm133 = vcmask 1042434
    %v134 = vsel %vm133, %v125, %v126
    %v135 = vsel %vm59, %v132, %v134
    %vm136 = vcmask 1044484
    %v137 = vsel %vm136, %v127, %v128
    %vm138 = vcmask 1046534
    %v139 = vsel %vm138, %v129, %v130
    %vm140 = vcmask 1045508
    %v141 = vsel %vm140, %v137, %v139
    %vm142 = vcmask 1043456
    %v143 = vsel %vm142, %v135, %v141
    %v145 = vadd.f32 %v37, %v143
    %146 = vst [vmem:[#allocation6] sm:$0xff] %v145
    // Predicated region
    $region14: #{tpu_custom_call.1} parent=1 // pred_check
      _
    $region15: #{tpu_custom_call.1} parent=1 // pred_check_branch
      %148 = sbr.rel (0) target = $region17
    $region16: #{tpu_custom_call.1} parent=1 // pred_region
      %150 = vsyncadd [#allocation4], 0
      %s152 = sshll.u32 [#allocation5], 4
      %s153 = int_to_ptr.vmem [resolvable:$true] %s152
      %s154 = sshll.u32 %s1, 4
      %s155 = int_to_ptr.hbm [resolvable:$true] %s154
      %157 = dma.vmem_to_hbm [thread:$0]  %s153, 256, %s155, [#allocation4]
    $region17: #{tpu_custom_call.1} parent=1 // pred_fallthru
      _
    // Predicated region
    $region18: #{tpu_custom_call.1} parent=1 // pred_check
      _
    $region19: #{tpu_custom_call.1} parent=1 // pred_check_branch
      %159 = sbr.rel (0) target = $region21
    $region20: #{tpu_custom_call.1} parent=1 // pred_region
      %161 = vsyncadd [#allocation7], 0
      %s163 = sshll.u32 [#allocation6], 4
      %s164 = int_to_ptr.vmem [resolvable:$true] %s163
      %s165 = sshll.u32 %s2, 4
      %s166 = int_to_ptr.hbm [resolvable:$true] %s165
      %168 = dma.vmem_to_hbm [thread:$0]  %s164, 128, %s166, [#allocation7]
    $region21: #{tpu_custom_call.1} parent=1 // pred_fallthru
      _
    // Predicated region
    $region22: #{tpu_custom_call.1} parent=1 // pred_check
      _
    $region23: #{tpu_custom_call.1} parent=1 // pred_check_branch
      %170 = sbr.rel (0) target = $region25
    $region24: #{tpu_custom_call.1} parent=1 // pred_region
      %172 = dma.done [#allocation4], 256
    $region25: #{tpu_custom_call.1} parent=1 // pred_fallthru
      _
    // Predicated region
    $region26: #{tpu_custom_call.1} parent=1 // pred_check
      _
    $region27: #{tpu_custom_call.1} parent=1 // pred_check_branch
      %174 = sbr.rel (0) target = $region29
    $region28: #{tpu_custom_call.1} parent=1 // pred_region
      %176 = dma.done [#allocation7], 128
    $region29: #{tpu_custom_call.1} parent=1 // pred_fallthru
      _
    %177 = vsyncpa [#allocation3], 1
    %178 = vsyncpa [#allocation4], 1
    %179 = vsyncpa [#allocation7], 1

</llo_original>
